<compile_context>
chip_gen: v7x
topology: tpu7x:2x2x1
jax: 0.10.0
libtpu: 0.0.40
codegen_flags: <defaults>
</compile_context>

<pallas_src>
import numpy as np
import jax
import jax.numpy as jnp
from jax.experimental import pallas as pl
from jax.experimental.pallas import tpu as pltpu


_FUSED_OPERATOR_MAX_BYTES = 16 << 20   # dense fused operator used up to ~subdiv 3


def _interp_matrix(n_in):
    """1-D bilinear interp matrix for out_size = 2*n_in - 1, align_corners=True.

    Scale factor is exactly 0.5, so even output rows copy an input row and odd
    output rows average two neighbours (exact F.interpolate weights).
    """
    n_out = 2 * n_in - 1
    M = np.zeros((n_out, n_in), np.float32)
    for i in range(n_out):
        if i % 2 == 0:
            M[i, i // 2] = 1.0
        else:
            M[i, i // 2] = 0.5
            M[i, i // 2 + 1] = 0.5
    return M


class IcoUpsampleConfig:
    """Ports the index-buffer construction of _IcoBase.__init__ / setup_g_padding /
    _IcoUpsample.__init__ (in_feature_depth == 1, corner_mode == 'zeros')."""

    def __init__(self, in_features, out_features, in_subdivisions, out_subdivisions,
                 in_feature_depth=1, out_feature_depth=1, corner_mode="zeros"):
        # TODO(synk): in_feature_depth == 6 (channel-rolled padding) and
        #             corner_mode == 'average' variants are not implemented here.
        assert in_feature_depth == 1
        assert corner_mode == "zeros"
        assert in_subdivisions != out_subdivisions  # upsample => stride = 2 in the base class

        self.in_channels = in_features * in_feature_depth
        self.out_channels = out_features * out_feature_depth
        stride = 2
        bh = 2 ** in_subdivisions                     # base_height_in
        self.base_height_in = bh
        self.height_in = bh * 5
        self.width_in = bh * 2
        pbh = bh + 2                                  # padded_base_height_in
        self.padded_height_in = pbh * 5
        self.padded_width_in = self.width_in + 2
        pWh = self.padded_width_in // 2
        # NOTE: the PyTorch base class uses base_height_in // stride even for the
        # upsample module; reproduced verbatim.
        bh_out = bh // stride

        H, W = self.height_in, self.width_in
        pH, pW = self.padded_height_in, self.padded_width_in

        # ---- out-corner targets (corner_mode == 'zeros') ----
        corner_ty = np.tile(np.arange(1, 6)[:, None] * bh_out - 1, (2, 1))       # (10, 1)
        corner_tx = np.array([0] * 5 + [bh_out] * 5)[:, None]                     # (10, 1)
        self.corner_ty = jnp.asarray(corner_ty, jnp.int32)
        self.corner_tx = jnp.asarray(corner_tx, jnp.int32)

        # ---- setup_g_padding (depth == 1 path) ----
        pad_len_long = bh
        pad_len_short = bh - 1
        pad_len_variable = pad_len_short              # corner_mode == 'zeros'
        prev_map2 = [4, 0, 1, 2, 3]
        next_map2 = [1, 2, 3, 4, 0]
        p_sy, p_sx, p_ty, p_tx = [], [], [], []
        cu_sy, cu_sx, cu_ty, cu_tx = [], [], [], []
        cd_sy, cd_sx, cd_ty, cd_tx = [], [], [], []
        for i in range(5):
            cu_ty += [i * pbh] * pad_len_variable
            cu_tx += list(range(2, 2 + pad_len_variable))
            cu_sy += list(range(prev_map2[i] * bh, prev_map2[i] * bh + pad_len_variable))
            cu_sx += [0] * pad_len_variable
            cu_ty += [(i + 1) * pbh - 1] * pad_len_long
            cu_tx += list(range(pWh, pWh + pad_len_long))
            cu_sy += list(range(next_map2[i] * bh, next_map2[i] * bh + pad_len_long))
            cu_sx += [-1] * pad_len_long

            cd_ty += list(range(i * pbh + 1, i * pbh + 1 + pad_len_short))
            cd_tx += [-1] * pad_len_short
            cd_sy += [(prev_map2[i] + 1) * bh - 1] * pad_len_short
            cd_sx += list(range(bh + 1, bh + 1 + pad_len_short))
            cd_ty += list(range(i * pbh + 1, i * pbh + 1 + pad_len_long))
            cd_tx += [0] * pad_len_long
            cd_sy += [next_map2[i] * bh] * pad_len_long
            cd_sx += list(range(0, pad_len_long))

            p_ty += [i * pbh] * pad_len_variable
            p_tx += list(range(pWh + 1, pWh + 1 + pad_len_variable))
            p_sy += [(prev_map2[i] + 1) * bh - 1] * pad_len_variable
            p_sx += list(range(1, 1 + pad_len_variable))
            p_ty += [(i + 1) * pbh - 1] * pad_len_long
            p_tx += list(range(1, 1 + pad_len_long))
            p_sy += [next_map2[i] * bh] * pad_len_long
            p_sx += list(range(bh, bh + pad_len_long))

        # depth == 1: plain + ch_up + ch_down merged; normalize negative indices.
        pad_ty = np.array(p_ty + cu_ty + cd_ty) % pH
        pad_tx = np.array(p_tx + cu_tx + cd_tx) % pW
        pad_sy = np.array(p_sy + cu_sy + cd_sy) % H
        pad_sx = np.array(p_sx + cu_sx + cd_sx) % W
        self.pad_ty = jnp.asarray(pad_ty, jnp.int32)
        self.pad_tx = jnp.asarray(pad_tx, jnp.int32)
        self.pad_sy = jnp.asarray(pad_sy, jnp.int32)
        self.pad_sx = jnp.asarray(pad_sx, jnp.int32)

        row_target = (np.arange(1, pbh - 1) + np.arange(0, pbh * 5, pbh)[:, None]).flatten()
        self.row_target = jnp.asarray(row_target, jnp.int32)

        pcorner_x = np.array([1, pWh])
        pcorner_y = np.arange(1, 6)[:, None] * pbh - 2
        self.pcorner_x = jnp.asarray(pcorner_x, jnp.int32)
        self.pcorner_y = jnp.asarray(pcorner_y, jnp.int32)

        # ---- _IcoUpsample.__init__ ----
        factor = 2
        col_start = 2
        col_length = W * factor
        row_offset = 1
        bh_out_up = bh * factor
        pbh_out_up = pbh * factor
        out_row_indices = ((np.arange(bh_out_up)
                            + np.arange(0, 5 * pbh_out_up, pbh_out_up)[:, None]).flatten()
                           + row_offset)

        # (interpolate -> narrow cols -> select rows) as two matmul matrices.
        R_full = _interp_matrix(pH)                                    # (2*pH-1, pH)
        W_full = _interp_matrix(pW)                                    # (2*pW-1, pW)
        R_sel = R_full[out_row_indices]                                # (Ho, pH)
        W_sel = W_full[col_start:col_start + col_length].T             # (pW, Wo)
        self.R = jnp.asarray(R_sel)
        self.Wm = jnp.asarray(W_sel)
        self.out_height = R_sel.shape[0]
        self.out_width = W_sel.shape[1]
        Ho, Wo = self.out_height, self.out_width

        # Out-corner zero mask for the separable fallback (fused into that kernel).
        out_mask = np.ones((Ho, Wo), np.float32)
        out_mask[corner_ty, corner_tx] = 0.0
        self.out_mask = jnp.asarray(out_mask)

        # ---- Fused dense operator:  y_flat = x_flat @ M ---------------------
        # Folds g_pad (wrap-around scatter + interior copy + pcorner zero), both
        # bilinear interp matmuls (R, W) and the out-corner zeroing into a single
        # (H*W, Ho*Wo) matrix, applied independently to every (batch, channel).
        fused_bytes = 4 * H * W * Ho * Wo
        if fused_bytes <= _FUSED_OPERATOR_MAX_BYTES:
            P = np.zeros((pH * pW, H * W), np.float32)        # x_pad_flat = P @ x_flat
            # 1) wrap-around padding scatter (sequential, last write wins — matches PyTorch)
            for ty, tx, sy, sx in zip(pad_ty, pad_tx, pad_sy, pad_sx):
                row = ty * pW + tx
                P[row, :] = 0.0
                P[row, sy * W + sx] = 1.0
            # 2) interior copy: outputs[:, :, row_target, 1:1+W] = inputs
            for r in range(H):
                tr = int(row_target[r])
                for c in range(W):
                    row = tr * pW + (1 + c)
                    P[row, :] = 0.0
                    P[row, r * W + c] = 1.0
            # 3) pcorner zero (applied last, like PyTorch)
            for py in pcorner_y.ravel():
                for px in pcorner_x.ravel():
                    P[int(py) * pW + int(px), :] = 0.0
            # Compose with  y = R @ x_pad @ W  ->  M[k, o*Wo+s]
            P3 = P.reshape(pH, pW, H * W)
            T = np.einsum('op,pqk,qs->kos', R_sel, P3, W_sel, optimize=True)
            # 4) out-corner zeroing folded into the operator columns
            for ty, tx in zip(corner_ty.ravel(), corner_tx.ravel()):
                T[:, int(ty), int(tx)] = 0.0
            self.M = jnp.asarray(T.reshape(H * W, Ho * Wo).astype(np.float32))
        else:
            self.M = None


# ----------------------------------------------------------------------------
# Fast path: ONE lane-dense matmul per batch element (pad + interp + crop +
# corner-zero all folded into M). No plain-JAX scatters, no post-kernel passes.
# ----------------------------------------------------------------------------
def _ico_upsample_fused_kernel(x_ref, m_ref, o_ref):
    # x_ref: (C, H*W)      all channels of one batch element
    # m_ref: (H*W, Ho*Wo)  fused pad + bilinear-x2 + crop/select + corner-zero operator
    # o_ref: (C, Ho*Wo)    lane-dense (Ho*Wo is a multiple of 128) => unmasked stores
    o_ref[...] = jnp.dot(x_ref[...], m_ref[...],
                         preferred_element_type=jnp.float32).astype(o_ref.dtype)


def pallas_ico_upsample_fused(x, M, out_height, out_width):
    B, C, H, W = x.shape
    HW = H * W
    HoWo = out_height * out_width
    xf = x.reshape(B, C, HW)                          # free row-major reshape
    yf = pl.pallas_call(
        _ico_upsample_fused_kernel,
        out_shape=jax.ShapeDtypeStruct((B, C, HoWo), x.dtype),
        grid=(B,),                                    # parallel over batch: keeps both v7x TCs busy
        in_specs=[
            pl.BlockSpec((None, C, HW), lambda b: (b, 0, 0)),
            pl.BlockSpec((HW, HoWo), lambda b: (0, 0)),   # constant block index: loaded once
        ],
        out_specs=pl.BlockSpec((None, C, HoWo), lambda b: (b, 0, 0)),
        compiler_params=pltpu.CompilerParams(
            dimension_semantics=("parallel",)),
    )(xf, M)
    return yf.reshape(B, C, out_height, out_width)


# ----------------------------------------------------------------------------
# Fallback for large subdivisions (dense M would not fit): separable
# bilinear-x2 as  out = (R @ x_pad @ W) * corner_mask  per (batch, channel).
# ----------------------------------------------------------------------------
def _ico_upsample_separable_kernel(x_ref, r_ref, w_ref, mask_ref, o_ref):
    # x_ref: (pH, pW)   padded face-stack for one (batch, channel)
    # r_ref: (Ho, pH)   row interp + row-select matrix
    # w_ref: (pW, Wo)   col interp + col-narrow matrix
    # mask_ref: (Ho, Wo) out-corner zero mask, fused (no post-kernel HBM pass)
    t = jnp.dot(r_ref[...], x_ref[...], preferred_element_type=jnp.float32)   # (Ho, pW)
    y = jnp.dot(t, w_ref[...], preferred_element_type=jnp.float32)            # (Ho, Wo)
    o_ref[...] = (y * mask_ref[...]).astype(o_ref.dtype)


def pallas_ico_upsample_separable(x_pad, R, Wm, out_mask):
    # TODO(synk): for very large subdivisions, block over channels and emit a
    #             lane-dense (Ho*Wo) output layout here as well.
    B, C, pH, pW = x_pad.shape
    Ho, Wo = R.shape[0], Wm.shape[1]
    return pl.pallas_call(
        _ico_upsample_separable_kernel,
        out_shape=jax.ShapeDtypeStruct((B, C, Ho, Wo), x_pad.dtype),
        grid=(B, C),
        in_specs=[
            pl.BlockSpec((None, None, pH, pW), lambda b, c: (b, c, 0, 0)),
            pl.BlockSpec((Ho, pH), lambda b, c: (0, 0)),
            pl.BlockSpec((pW, Wo), lambda b, c: (0, 0)),
            pl.BlockSpec((Ho, Wo), lambda b, c: (0, 0)),
        ],
        out_specs=pl.BlockSpec((None, None, Ho, Wo), lambda b, c: (b, c, 0, 0)),
        compiler_params=pltpu.CompilerParams(
            dimension_semantics=("parallel", "parallel")),
    )(x_pad, R, Wm, out_mask)


# ----------------------------------------------------------------------------
# Plain-JAX g_pad (only used by the large-subdivision fallback and the reference)
# ----------------------------------------------------------------------------
def g_pad(x, cfg):
    B, C, H, W = x.shape
    out = jnp.zeros((B, C, cfg.padded_height_in, cfg.padded_width_in), x.dtype)
    # icosahedral wrap-around padding scatter
    out = out.at[:, :, cfg.pad_ty, cfg.pad_tx].set(x[:, :, cfg.pad_sy, cfg.pad_sx])
    # interior copy (narrow + index_copy_)
    out = out.at[:, :, cfg.row_target, 1:1 + W].set(x)
    # pcorner handling (corner_mode == 'zeros')
    out = out.at[:, :, cfg.pcorner_y, cfg.pcorner_x].set(0.0)
    return out


def ico_upsample_forward(x, cfg):
    if cfg.M is not None:
        # Everything (pad, bilinear x2, crop/select, corner-zero) fused into one
        # MXU matmul per batch element inside a single pallas_call.
        return pallas_ico_upsample_fused(x, cfg.M, cfg.out_height, cfg.out_width)
    # Large-subdivision fallback: pad in plain JAX, separable matmuls in Pallas
    # with the out-corner mask fused into the kernel.
    # TODO(synk): move the static g_pad gather into the kernel for this path too.
    xp = g_pad(x, cfg)
    return pallas_ico_upsample_separable(xp, cfg.R, cfg.Wm, cfg.out_mask)


if __name__ == "__main__":
    cfg = IcoUpsampleConfig(in_features=4, out_features=4,
                            in_subdivisions=2, out_subdivisions=3,
                            in_feature_depth=1, out_feature_depth=1,
                            corner_mode="zeros")
    B = 2
    key = jax.random.PRNGKey(0)
    x = jax.random.normal(key, (B, cfg.in_channels, cfg.height_in, cfg.width_in),
                          dtype=jnp.float32)   # (2, 4, 20, 8)

    y = jax.block_until_ready(ico_upsample_forward(x, cfg))
    assert y.shape == (B, cfg.in_channels, cfg.out_height, cfg.out_width), y.shape

    # Reference: plain-JAX reproduction of the PyTorch pipeline
    # (g_pad -> bilinear x2 via R/W -> corner zero).
    xp = g_pad(x, cfg)
    ref = jnp.einsum('oh,bchw,ws->bcos', cfg.R, xp, cfg.Wm)
    ref = ref.at[:, :, cfg.corner_ty, cfg.corner_tx].set(0.0)
    assert np.allclose(np.asarray(y), np.asarray(ref), atol=1e-5, rtol=1e-5)

    # Also exercise the large-subdivision fallback kernel once for coverage.
    y_sep = jax.block_until_ready(
        pallas_ico_upsample_separable(xp, cfg.R, cfg.Wm, cfg.out_mask))
    assert np.allclose(np.asarray(y_sep), np.asarray(ref), atol=1e-5, rtol=1e-5)

    print("KERNEL_OK")
</pallas_src>

<mosaic_0001>
module attributes {stable_mosaic.version = 11 : i64} {
  func.func @_ico_upsample_fused_kernel(%arg0: i32, %arg1: memref<1x4x160xf32, #tpu.memory_space<vmem>>, %arg2: memref<160x640xf32, #tpu.memory_space<vmem>>, %arg3: memref<1x4x640xf32, #tpu.memory_space<vmem>>) attributes {dimension_semantics = [#tpu.dimension_semantics<parallel>], iteration_bounds = array<i64: 2>, scalar_prefetch = 0 : i64, scratch_operands = 0 : i64, tpu.core_type = #tpu.core_type<tc>, window_params = [{transform_indices = @transform_0, window_bounds = array<i64: 1, 4, 160>}, {pipeline_mode = #tpu.pipeline_mode<synchronous>, transform_indices = @transform_1, window_bounds = array<i64: 160, 640>}, {transform_indices = @transform_2, window_bounds = array<i64: 1, 4, 640>}]} {
    %c0 = arith.constant 0 : index
    %c0_0 = arith.constant 0 : index
    %c0_1 = arith.constant 0 : index
    %0 = vector.load %arg1[%c0, %c0_0, %c0_1] : memref<1x4x160xf32, #tpu.memory_space<vmem>>, vector<1x4x160xf32>
    %1 = vector.shape_cast %0 : vector<1x4x160xf32> to vector<4x160xf32>
    %c0_2 = arith.constant 0 : index
    %c0_3 = arith.constant 0 : index
    %2 = vector.load %arg2[%c0_2, %c0_3] : memref<160x640xf32, #tpu.memory_space<vmem>>, vector<160x640xf32>
    %cst = arith.constant dense<0.000000e+00> : vector<4x640xf32>
    %3 = tpu.matmul %1, %2, %cst {dimension_numbers = #tpu.dot_dimension_numbers<[1], [0], [0], [1], [0, 0, 1, 1], [], []>} : vector<4x160xf32>, vector<160x640xf32>, vector<4x640xf32> -> vector<4x640xf32>
    %c0_4 = arith.constant 0 : index
    %c0_5 = arith.constant 0 : index
    %c0_6 = arith.constant 0 : index
    %4 = vector.load %arg3[%c0_4, %c0_5, %c0_6] : memref<1x4x640xf32, #tpu.memory_space<vmem>>, vector<1x4x640xf32>
    %5 = vector.shape_cast %4 : vector<1x4x640xf32> to vector<4x640xf32>
    %6 = vector.shape_cast %3 : vector<4x640xf32> to vector<1x4x640xf32>
    tpu.vector_store %arg3[%c0_4, %c0_5, %c0_6], %6 {strides = array<i32>} : memref<1x4x640xf32, #tpu.memory_space<vmem>>, vector<1x4x640xf32>,
    return
  }
  func.func @transform_0(%arg0: i32) -> (i32, i32, i32) {
    %c0_i32 = arith.constant 0 : i32
    %c0_i32_0 = arith.constant 0 : i32
    %c0_i32_1 = arith.constant 0 : i32
    return %arg0, %c0_i32, %c0_i32_0 : i32, i32, i32
  }
  func.func @transform_1(%arg0: i32) -> (i32, i32) {
    %c0_i32 = arith.constant 0 : i32
    %c0_i32_0 = arith.constant 0 : i32
    %c0_i32_1 = arith.constant 0 : i32
    return %c0_i32, %c0_i32_0 : i32, i32
  }
  func.func @transform_2(%arg0: i32) -> (i32, i32, i32) {
    %c0_i32 = arith.constant 0 : i32
    %c0_i32_0 = arith.constant 0 : i32
    %c0_i32_1 = arith.constant 0 : i32
    return %arg0, %c0_i32, %c0_i32_0 : i32, i32, i32
  }
}

</mosaic_0001>

<llo_original>
// kernel: tpu_custom_call.1
$region0: #{tpu_custom_call.1}
  #allocation0 [shape = 'u32[]', space=smem, size = 0x4, offset = 0x4, fixed_abs, tag = 'smem constant byte address 0x4 - core index']
  #allocation1 [shape = 'u32[144,128]{1,0:T(1,128)}', space=vmem, size = 0x12000, scoped, tag = 'internal scratch']
  %s0 = inlined_call_operand.hbm [shape: f32[2,4,160], index: 0, kind: input, shape index: {}]
  %s1 = inlined_call_operand.hbm [shape: f32[160,640], index: 1, kind: input, shape index: {}]
  %s2 = inlined_call_operand.hbm [shape: f32[2,4,640], index: 2, kind: output, shape index: {}]
  %s3 = sld [smem:[#allocation0]]
  $region49: #{tpu_custom_call.1} parent=0
    _
  %s5 = ssub.s32 1, %s3
  %s6 = scalar_select 0, %s5, %s3
  $region1: #{tpu_custom_call.1} parent=0
    #allocation2 [shape = 'u8[8192]{0}', space=vmem, size = 0x2000, scoped, tag = 'input window, operand 0']
    #allocation3 [shape = 's32[2]{0}', space=sflag, size = 0x8, scoped, tag = 'scoped memory for tpu_custom_call.1']
    #allocation4 [shape = 's32[2]{0}', space=sflag, size = 0x8, scoped, tag = 'scoped memory for tpu_custom_call.1']
    #allocation5 [shape = 'u8[409600]{0}', space=vmem, size = 0x64000, scoped, tag = 'input window, operand 1, single buffered']
    #allocation6 [shape = 's32[1]{0}', space=sflag, size = 0x4, scoped, tag = 'scoped memory for tpu_custom_call.1']
    #allocation7 [shape = 'u8[20480]{0}', space=vmem, size = 0x5000, scoped, tag = 'output window, operand 0']
    %7 = vsyncpa [#allocation3], 0
    %s8 = scalar_lea.sflag [#allocation3], 1
    %9 = vsyncpa %s8, 0
    %10 = vsyncpa [#allocation6], 0
    %11 = vsyncpa [#allocation4], 0
    %s12 = scalar_lea.sflag [#allocation4], 1
    %13 = vsyncpa %s12, 0
    loop: start=0, step=1, limit=4
    $region2: #{tpu_custom_call.1} parent=1 // loop_pre_header
      _
    $region3: #{tpu_custom_call.1} parent=1 // loop_header
      %s15 = sphi 0, %s19
      %p16 = scmp.ge.s32.totalorder %s15, 4
      %s25 = sphi 0, %s27
      %s28 = sphi 0, %s25
      %s29 = sphi 0, %s28
      %s45 = sphi 0, %s29
      %s49 = sphi 0, %s49
      %s51 = sphi 0, %s49
      %s52 = sphi 0, %s51
      %s66 = sphi 0, %s52
      %s72 = sphi 0, %s74
      %s75 = sphi 0, %s72
      %s76 = sphi 0, %s75
      %s92 = sphi 0, %s76
    $region4: #{tpu_custom_call.1} parent=1 // loop_header_branch
      %18 = sbr.rel (%p16) target = $region8
    $region5: #{tpu_custom_call.1} parent=1 // loop_body
      %s20 = ssub.s32 %s15, 1
      %s21 = ssub.s32 %s15, 2
      %s22 = sadd.s32 %s15, 1
      %s23 = ssub.s32 %s15, %s22
      %p24 = scmp.eq.s32.totalorder %s23, 0
      %s26 = sadd.s32 %s25, 1
      %s27 = scalar_select %p24, %s25, %s26
      %p30 = pneg %p24
      %p31 = scmp.eq.s32.totalorder %s15, 1
      %p32 = por %p30, %p31
      %p33 = scmp.ne.s32.totalorder %s25, %s28
      %p34 = scmp.eq.s32.totalorder %s15, 0
      %p35 = por %p33, %p34
      %p36 = scmp.ne.s32.totalorder %s25, %s28
      %p37 = scmp.eq.s32.totalorder %s20, 1
      %p38 = por %p36, %p37
      %p39 = scmp.ne.s32.totalorder %s28, %s29
      %p40 = scmp.eq.s32.totalorder %s20, 0
      %p41 = por %p39, %p40
      %p42 = scmp.ne.s32.totalorder %s28, %s29
      %p43 = scmp.eq.s32.totalorder %s21, 1
      %p44 = por %p42, %p43
      %p46 = scmp.ne.s32.totalorder %s29, %s45
      %p47 = scmp.eq.s32.totalorder %s21, 0
      %p48 = por %p46, %p47
      %s50 = sadd.s32 %s49, 1
      %p53 = scmp.eq.s32.totalorder %s15, 1
      %p54 = scmp.ne.s32.totalorder %s49, %s51
      %p55 = scmp.eq.s32.totalorder %s15, 0
      %p56 = por %p54, %p55
      %p57 = scmp.ne.s32.totalorder %s49, %s51
      %p58 = scmp.eq.s32.totalorder %s20, 1
      %p59 = por %p57, %p58
      %p60 = scmp.ne.s32.totalorder %s51, %s52
      %p61 = scmp.eq.s32.totalorder %s20, 0
      %p62 = por %p60, %p61
      %p63 = scmp.ne.s32.totalorder %s51, %s52
      %p64 = scmp.eq.s32.totalorder %s21, 1
      %p65 = por %p63, %p64
      %p67 = scmp.ne.s32.totalorder %s52, %s66
      %p68 = scmp.eq.s32.totalorder %s21, 0
      %p69 = por %p67, %p68
      %s70 = ssub.s32 %s15, %s22
      %p71 = scmp.eq.s32.totalorder %s70, 0
      %s73 = sadd.s32 %s72, 1
      %s74 = scalar_select %p71, %s72, %s73
      %p77 = pneg %p71
      %p78 = scmp.eq.s32.totalorder %s15, 1
      %p79 = por %p77, %p78
      %p80 = scmp.ne.s32.totalorder %s72, %s75
      %p81 = scmp.eq.s32.totalorder %s15, 0
      %p82 = por %p80, %p81
      %p83 = scmp.ne.s32.totalorder %s72, %s75
      %p84 = scmp.eq.s32.totalorder %s20, 1
      %p85 = por %p83, %p84
      %p86 = scmp.ne.s32.totalorder %s75, %s76
      %p87 = scmp.eq.s32.totalorder %s20, 0
      %p88 = por %p86, %p87
      %p89 = scmp.ne.s32.totalorder %s75, %s76
      %p90 = scmp.eq.s32.totalorder %s21, 1
      %p91 = por %p89, %p90
      %p93 = scmp.ne.s32.totalorder %s76, %s92
      %p94 = scmp.eq.s32.totalorder %s21, 0
      %p95 = por %p93, %p94
      %p96 = scmp.le.s32.totalorder 1, %s15
      %p97 = scmp.lt.s32.totalorder %s15, 3
      %p98 = pnand %p96, %p97
      %p99 = pneg %p98
      // Predicated region
      $region9: #{tpu_custom_call.1} parent=5 // pred_check
        _
      $region10: #{tpu_custom_call.1} parent=5 // pred_check_branch
        %101 = sbr.rel (%p98) target = $region12
      $region11: #{tpu_custom_call.1} parent=5 // pred_region
        %s102 = ssub.s32 %s15, 1
        // Predicated region
        $region13: #{tpu_custom_call.1} parent=11 // pred_check
          %p103 = pneg %p62
        $region14: #{tpu_custom_call.1} parent=11 // pred_check_branch
          %105 = sbr.rel (%p103) target = $region16
        $region15: #{tpu_custom_call.1} parent=11 // pred_region
          %s107 = ssub.s32 12800, 12800
          %108 = vsyncadd [#allocation6], %s107
          %s109 = sshll.u32 [#allocation5], 4
          %s110 = int_to_ptr.vmem [resolvable:$true] %s109
          %115 = dma.hbm_to_vmem [thread:$0]  %s1, 12800, %s110, [#allocation6], 640, 640, 40
        $region16: #{tpu_custom_call.1} parent=11 // pred_fallthru
          _
      $region12: #{tpu_custom_call.1} parent=5 // pred_fallthru
        _
      %p116 = scmp.lt.s32.totalorder %s15, 2
      // Predicated region
      $region17: #{tpu_custom_call.1} parent=5 // pred_check
        %p117 = pneg %p116
      $region18: #{tpu_custom_call.1} parent=5 // pred_check_branch
        %119 = sbr.rel (%p117) target = $region20
      $region19: #{tpu_custom_call.1} parent=5 // pred_region
        // Predicated region
        $region21: #{tpu_custom_call.1} parent=19 // pred_check
          %p120 = pneg %p35
        $region22: #{tpu_custom_call.1} parent=19 // pred_check_branch
          %122 = sbr.rel (%p120) target = $region24
        $region23: #{tpu_custom_call.1} parent=19 // pred_region
          %s123 = sand.u32 %s25, 1
          %s124 = scalar_lea.sflag [#allocation3], %s123
          %s125 = sand.u32 %s25, 1
          %s126 = smul.addr %s125, 8
          %s127 = scalar_lea.vmem [#allocation2], %s126
          %s129 = ssub.s32 128, 128
          %130 = vsyncadd %s124, %s129
          %s131 = smul.addr %s15, 2
          %s132 = smul.addr %s131, 64
          %s133 = scalar_lea.hbm %s0, %s132
          %s135 = sshll.u32 %s127, 4
          %s136 = int_to_ptr.vmem [resolvable:$true] %s135
          %138 = dma.hbm_to_vmem [thread:$0]  %s133, 128, %s136, %s124
        $region24: #{tpu_custom_call.1} parent=19 // pred_fallthru
          _
      $region20: #{tpu_custom_call.1} parent=5 // pred_fallthru
        _
      %p139 = scmp.le.s32.totalorder 1, %s15
      %p140 = scmp.lt.s32.totalorder %s15, 3
      %p141 = pnand %p139, %p140
      %p142 = pneg %p141
      // Predicated region
      $region25: #{tpu_custom_call.1} parent=5 // pred_check
        _
      $region26: #{tpu_custom_call.1} parent=5 // pred_check_branch
        %144 = sbr.rel (%p141) target = $region28
      $region27: #{tpu_custom_call.1} parent=5 // pred_region
        %s145 = ssub.s32 %s15, 1
        %s146 = sand.u32 %s28, 1
        %s147 = scalar_lea.sflag [#allocation3], %s146
        %s148 = sand.u32 %s28, 1
        %s149 = smul.addr %s148, 8
        %s150 = scalar_lea.vmem [#allocation2], %s149
        // Predicated region
        $region29: #{tpu_custom_call.1} parent=27 // pred_check
          %p151 = pneg %p41
        $region30: #{tpu_custom_call.1} parent=27 // pred_check_branch
          %153 = sbr.rel (%p151) target = $region32
        $region31: #{tpu_custom_call.1} parent=27 // pred_region
          %154 = dma.done %s147, 128
        $region32: #{tpu_custom_call.1} parent=27 // pred_fallthru
          _
        // Predicated region
        $region33: #{tpu_custom_call.1} parent=27 // pred_check
          %p155 = pneg %p62
        $region34: #{tpu_custom_call.1} parent=27 // pred_check_branch
          %157 = sbr.rel (%p155) target = $region36
        $region35: #{tpu_custom_call.1} parent=27 // pred_region
          %158 = dma.done [#allocation6], 12800
        $region36: #{tpu_custom_call.1} parent=27 // pred_fallthru
          _
        %s159 = sand.u32 %s28, 1
        %s160 = scalar_lea.sflag [#allocation3], %s159
        %s161 = sand.u32 %s28, 1
        %s162 = smul.addr %s161, 8
        %s163 = scalar_lea.vmem [#allocation2], %s162
        %p164 = pneg %p41
        %p165 = pneg %p38
        %p166 = pneg %p62
        %p167 = pneg %p59
        %p168 = pneg %p88
        %p169 = pneg %p85
        %s170 = sand.u32 %s75, 1
        %s171 = scalar_lea.sflag [#allocation4], %s170
        %s172 = sand.u32 %s75, 1
        %s173 = smul.addr %s172, 20
        %s174 = scalar_lea.vmem [#allocation7], %s173
        %v175 = vld [vmem:[%s150] sm:$0xff]
        %v176 = vld [vmem:[#allocation5] sm:$0xff]
        %v177 = vld [vmem:[#allocation5 + $0x8] sm:$0xff]
        %v178 = vld [vmem:[#allocation5 + $0x10] sm:$0xff]
        %v179 = vld [vmem:[#allocation5 + $0x18] sm:$0xff]
        %v180 = vld [vmem:[#allocation5 + $0x20] sm:$0xff]
        %v181 = vld [vmem:[#allocation5 + $0x28] sm:$0xff]
        %v182 = vld [vmem:[#allocation5 + $0x30] sm:$0xff]
        %v183 = vld [vmem:[#allocation5 + $0x38] sm:$0xff]
        %v184 = vld [vmem:[#allocation5 + $0x40] sm:$0xff]
        %v185 = vld [vmem:[#allocation5 + $0x48] sm:$0xff]
        %v186 = vld [vmem:[#allocation5 + $0x50] sm:$0xff]
        %v187 = vld [vmem:[#allocation5 + $0x58] sm:$0xff]
        %v188 = vld [vmem:[#allocation5 + $0x60] sm:$0xff]
        %v189 = vld [vmem:[#allocation5 + $0x68] sm:$0xff]
        %v190 = vld [vmem:[#allocation5 + $0x70] sm:$0xff]
        %v191 = vld [vmem:[#allocation5 + $0x78] sm:$0xff]
        %v192 = vld [vmem:[#allocation5 + $0x80] sm:$0xff]
        %v193 = vld [vmem:[#allocation5 + $0x88] sm:$0xff]
        %v194 = vld [vmem:[#allocation5 + $0x90] sm:$0xff]
        %v195 = vld [vmem:[#allocation5 + $0x98] sm:$0xff]
        %v196 = vld [vmem:[#allocation5 + $0xa0] sm:$0xff]
        %v197 = vld [vmem:[#allocation5 + $0xa8] sm:$0xff]
        %v198 = vld [vmem:[#allocation5 + $0xb0] sm:$0xff]
        %v199 = vld [vmem:[#allocation5 + $0xb8] sm:$0xff]
        %v200 = vld [vmem:[#allocation5 + $0xc0] sm:$0xff]
        %v201 = vld [vmem:[#allocation5 + $0xc8] sm:$0xff]
        %v202 = vld [vmem:[#allocation5 + $0xd0] sm:$0xff]
        %v203 = vld [vmem:[#allocation5 + $0xd8] sm:$0xff]
        %v204 = vld [vmem:[#allocation5 + $0xe0] sm:$0xff]
        %v205 = vld [vmem:[#allocation5 + $0xe8] sm:$0xff]
        %v206 = vld [vmem:[#allocation5 + $0xf0] sm:$0xff]
        %v207 = vld [vmem:[#allocation5 + $0xf8] sm:$0xff]
        %v208 = vld [vmem:[#allocation5 + $0x100] sm:$0xff]
        %v209 = vld [vmem:[#allocation5 + $0x108] sm:$0xff]
        %v210 = vld [vmem:[#allocation5 + $0x110] sm:$0xff]
        %v211 = vld [vmem:[#allocation5 + $0x118] sm:$0xff]
        %v212 = vld [vmem:[#allocation5 + $0x120] sm:$0xff]
        %v213 = vld [vmem:[#allocation5 + $0x128] sm:$0xff]
        %v214 = vld [vmem:[#allocation5 + $0x130] sm:$0xff]
        %v215 = vld [vmem:[#allocation5 + $0x138] sm:$0xff]
        %v216 = vld [vmem:[#allocation5 + $0x140] sm:$0xff]
        %v217 = vld [vmem:[#allocation5 + $0x148] sm:$0xff]
        %v218 = vld [vmem:[#allocation5 + $0x150] sm:$0xff]
        %v219 = vld [vmem:[#allocation5 + $0x158] sm:$0xff]
        %v220 = vld [vmem:[#allocation5 + $0x160] sm:$0xff]
        %v221 = vld [vmem:[#allocation5 + $0x168] sm:$0xff]
        %v222 = vld [vmem:[#allocation5 + $0x170] sm:$0xff]
        %v223 = vld [vmem:[#allocation5 + $0x178] sm:$0xff]
        %v224 = vld [vmem:[#allocation5 + $0x180] sm:$0xff]
        %v225 = vld [vmem:[#allocation5 + $0x188] sm:$0xff]
        %v226 = vld [vmem:[#allocation5 + $0x190] sm:$0xff]
        %v227 = vld [vmem:[#allocation5 + $0x198] sm:$0xff]
        %v228 = vld [vmem:[#allocation5 + $0x1a0] sm:$0xff]
        %v229 = vld [vmem:[#allocation5 + $0x1a8] sm:$0xff]
        %v230 = vld [vmem:[#allocation5 + $0x1b0] sm:$0xff]
        %v231 = vld [vmem:[#allocation5 + $0x1b8] sm:$0xff]
        %v232 = vld [vmem:[#allocation5 + $0x1c0] sm:$0xff]
        %v233 = vld [vmem:[#allocation5 + $0x1c8] sm:$0xff]
        %v234 = vld [vmem:[#allocation5 + $0x1d0] sm:$0xff]
        %v235 = vld [vmem:[#allocation5 + $0x1d8] sm:$0xff]
        %v236 = vld [vmem:[#allocation5 + $0x1e0] sm:$0xff]
        %v237 = vld [vmem:[#allocation5 + $0x1e8] sm:$0xff]
        %v238 = vld [vmem:[#allocation5 + $0x1f0] sm:$0xff]
        %v239 = vld [vmem:[#allocation5 + $0x1f8] sm:$0xff]
        %v240 = vld [vmem:[#allocation5 + $0x200] sm:$0xff]
        %v241 = vld [vmem:[#allocation5 + $0x208] sm:$0xff]
        %v242 = vld [vmem:[#allocation5 + $0x210] sm:$0xff]
        %v243 = vld [vmem:[#allocation5 + $0x218] sm:$0xff]
        %v244 = vld [vmem:[#allocation5 + $0x220] sm:$0xff]
        %v245 = vld [vmem:[#allocation5 + $0x228] sm:$0xff]
        %v246 = vld [vmem:[#allocation5 + $0x230] sm:$0xff]
        %v247 = vld [vmem:[#allocation5 + $0x238] sm:$0xff]
        %v248 = vld [vmem:[#allocation5 + $0x240] sm:$0xff]
        %v249 = vld [vmem:[#allocation5 + $0x248] sm:$0xff]
        %v250 = vld [vmem:[#allocation5 + $0x250] sm:$0xff]
        %v251 = vld [vmem:[#allocation5 + $0x258] sm:$0xff]
        %v252 = vld [vmem:[#allocation5 + $0x260] sm:$0xff]
        %v253 = vld [vmem:[#allocation5 + $0x268] sm:$0xff]
        %v254 = vld [vmem:[#allocation5 + $0x270] sm:$0xff]
        %v255 = vld [vmem:[#allocation5 + $0x278] sm:$0xff]
        %v256 = vld [vmem:[#allocation5 + $0x280] sm:$0xff]
        %v257 = vld [vmem:[#allocation5 + $0x288] sm:$0xff]
        %v258 = vld [vmem:[#allocation5 + $0x290] sm:$0xff]
        %v259 = vld [vmem:[#allocation5 + $0x298] sm:$0xff]
        %v260 = vld [vmem:[#allocation5 + $0x2a0] sm:$0xff]
        %v261 = vld [vmem:[#allocation5 + $0x2a8] sm:$0xff]
        %v262 = vld [vmem:[#allocation5 + $0x2b0] sm:$0xff]
        %v263 = vld [vmem:[#allocation5 + $0x2b8] sm:$0xff]
        %v264 = vld [vmem:[#allocation5 + $0x2c0] sm:$0xff]
        %v265 = vld [vmem:[#allocation5 + $0x2c8] sm:$0xff]
        %v266 = vld [vmem:[#allocation5 + $0x2d0] sm:$0xff]
        %v267 = vld [vmem:[#allocation5 + $0x2d8] sm:$0xff]
        %v268 = vld [vmem:[#allocation5 + $0x2e0] sm:$0xff]
        %v269 = vld [vmem:[#allocation5 + $0x2e8] sm:$0xff]
        %v270 = vld [vmem:[#allocation5 + $0x2f0] sm:$0xff]
        %v271 = vld [vmem:[#allocation5 + $0x2f8] sm:$0xff]
        %v272 = vld [vmem:[#allocation5 + $0x300] sm:$0xff]
        %v273 = vld [vmem:[#allocation5 + $0x308] sm:$0xff]
        %v274 = vld [vmem:[#allocation5 + $0x310] sm:$0xff]
        %v275 = vld [vmem:[#allocation5 + $0x318] sm:$0xff]
        %v277 = vcombine.high %v175, %v175
        %vm278 = vcmask 261120
        %v279 = vsel %vm278, %v277, 0
        %281 = vmatprep.subr.mxu0 %v177
        %282 = vmatpush1.msra.mxu0 %v176
        %283 = vmatprep.subr.mxu0 %v182
        %284 = vmatpush1.msra.mxu0 %v181
        %285 = vmatprep.subr.mxu0 %v187
        %286 = vmatpush1.msra.mxu0 %v186
        %287 = vmatprep.subr.mxu0 %v192
        %288 = vmatpush1.msra.mxu0 %v191
        %289 = vmatprep.subr.mxu0 %v197
        %290 = vmatpush1.msra.mxu0 %v196
        %291 = vmatprep.subr.mxu0 %v202
        %292 = vmatpush1.msra.mxu0 %v201
        %293 = vmatprep.subr.mxu0 %v207
        %294 = vmatpush1.msra.mxu0 %v206
        %295 = vmatprep.subr.mxu0 %v212
        %296 = vmatpush1.msra.mxu0 %v211
        %297 = vmatprep.subr.mxu0 %v217
        %298 = vmatpush1.msra.mxu0 %v216
        %299 = vmatprep.subr.mxu0 %v222
        %300 = vmatpush1.msra.mxu0 %v221
        %301 = vmatprep.subr.mxu0 %v227
        %302 = vmatpush1.msra.mxu0 %v226
        %303 = vmatprep.subr.mxu0 %v232
        %304 = vmatpush1.msra.mxu0 %v231
        %305 = vmatprep.subr.mxu0 %v237
        %306 = vmatpush1.msra.mxu0 %v236
        %307 = vmatprep.subr.mxu0 %v242
        %308 = vmatpush1.msra.mxu0 %v241
        %309 = vmatprep.subr.mxu0 %v247
        %310 = vmatpush1.msra.mxu0 %v246
        %311 = vmatprep.subr.mxu0 %v252
        %312 = vmatpush1.msra.mxu0 %v251
        %313 = vmatprep.subr.mxu0 %v257
        %314 = vmatpush1.msra.mxu0 %v256
        %315 = vmatprep.subr.mxu0 %v262
        %316 = vmatpush1.msra.mxu0 %v261
        %317 = vmatprep.subr.mxu0 %v267
        %318 = vmatpush1.msra.mxu0 %v266
        %319 = vmatprep.subr.mxu0 %v272
        %320 = vmatpush1.msra.mxu0 %v271
        %321 = vmatprep.subr.mxu0 0.0
        %322 = vmatpush1.msra.mxu0 0.0
        %323 = vmatprep.subr.mxu0 0.0
        %324 = vmatpush1.msra.mxu0 0.0
        %325 = vmatprep.subr.mxu0 0.0
        %326 = vmatpush1.msra.mxu0 0.0
        %327 = vmatprep.subr.mxu0 0.0
        %328 = vmatpush1.msra.mxu0 0.0
        %329 = vmatprep.subr.mxu0 0.0
        %330 = vmatpush1.msra.mxu0 0.0
        %331 = vmatprep.subr.mxu0 0.0
        %332 = vmatpush1.msra.mxu0 0.0
        %333 = vmatprep.subr.mxu0 0.0
        %334 = vmatpush1.msra.mxu0 0.0
        %335 = vmatprep.subr.mxu0 0.0
        %336 = vmatpush1.msra.mxu0 0.0
        %337 = vmatprep.subr.mxu0 0.0
        %338 = vmatpush1.msra.mxu0 0.0
        %339 = vmatprep.subr.mxu0 0.0
        %340 = vmatpush1.msra.mxu0 0.0
        %341 = vmatprep.subr.mxu0 0.0
        %342 = vmatpush1.msra.mxu0 0.0
        %343 = vmatprep.subr.mxu0 0.0
        %344 = vmatpush1.msra.mxu0 0.0
        %345 = vmatprep.mubr.f32.mxu0 %v279
        %346 = vmatmul.mubr.f32.gmra.mrb[0].mxu0 %v175
        %v347 = vpop.f32.mrb[0].mxu0
        %v348 = vadd.f32 0.0, %v347
        %v349 = vpop.f32.mrb[0].mxu0
        %v350 = vadd.f32 0.0, %v349
        %351 = vdwg.mxu0
        %352 = vmatprep.subr.mxu0 %v179
        %353 = vmatpush1.msra.mxu0 %v178
        %354 = vmatprep.subr.mxu0 %v184
        %355 = vmatpush1.msra.mxu0 %v183
        %356 = vmatprep.subr.mxu0 %v189
        %357 = vmatpush1.msra.mxu0 %v188
        %358 = vmatprep.subr.mxu0 %v194
        %359 = vmatpush1.msra.mxu0 %v193
        %360 = vmatprep.subr.mxu0 %v199
        %361 = vmatpush1.msra.mxu0 %v198
        %362 = vmatprep.subr.mxu0 %v204
        %363 = vmatpush1.msra.mxu0 %v203
        %364 = vmatprep.subr.mxu0 %v209
        %365 = vmatpush1.msra.mxu0 %v208
        %366 = vmatprep.subr.mxu0 %v214
        %367 = vmatpush1.msra.mxu0 %v213
        %368 = vmatprep.subr.mxu0 %v219
        %369 = vmatpush1.msra.mxu0 %v218
        %370 = vmatprep.subr.mxu0 %v224
        %371 = vmatpush1.msra.mxu0 %v223
        %372 = vmatprep.subr.mxu0 %v229
        %373 = vmatpush1.msra.mxu0 %v228
        %374 = vmatprep.subr.mxu0 %v234
        %375 = vmatpush1.msra.mxu0 %v233
        %376 = vmatprep.subr.mxu0 %v239
        %377 = vmatpush1.msra.mxu0 %v238
        %378 = vmatprep.subr.mxu0 %v244
        %379 = vmatpush1.msra.mxu0 %v243
        %380 = vmatprep.subr.mxu0 %v249
        %381 = vmatpush1.msra.mxu0 %v248
        %382 = vmatprep.subr.mxu0 %v254
        %383 = vmatpush1.msra.mxu0 %v253
        %384 = vmatprep.subr.mxu0 %v259
        %385 = vmatpush1.msra.mxu0 %v258
        %386 = vmatprep.subr.mxu0 %v264
        %387 = vmatpush1.msra.mxu0 %v263
        %388 = vmatprep.subr.mxu0 %v269
        %389 = vmatpush1.msra.mxu0 %v268
        %390 = vmatprep.subr.mxu0 %v274
        %391 = vmatpush1.msra.mxu0 %v273
        %392 = vmatprep.subr.mxu0 0.0
        %393 = vmatpush1.msra.mxu0 0.0
        %394 = vmatprep.subr.mxu0 0.0
        %395 = vmatpush1.msra.mxu0 0.0
        %396 = vmatprep.subr.mxu0 0.0
        %397 = vmatpush1.msra.mxu0 0.0
        %398 = vmatprep.subr.mxu0 0.0
        %399 = vmatpush1.msra.mxu0 0.0
        %400 = vmatprep.subr.mxu0 0.0
        %401 = vmatpush1.msra.mxu0 0.0
        %402 = vmatprep.subr.mxu0 0.0
        %403 = vmatpush1.msra.mxu0 0.0
        %404 = vmatprep.subr.mxu0 0.0
        %405 = vmatpush1.msra.mxu0 0.0
        %406 = vmatprep.subr.mxu0 0.0
        %407 = vmatpush1.msra.mxu0 0.0
        %408 = vmatprep.subr.mxu0 0.0
        %409 = vmatpush1.msra.mxu0 0.0
        %410 = vmatprep.subr.mxu0 0.0
        %411 = vmatpush1.msra.mxu0 0.0
        %412 = vmatprep.subr.mxu0 0.0
        %413 = vmatpush1.msra.mxu0 0.0
        %414 = vmatprep.subr.mxu0 0.0
        %415 = vmatpush1.msra.mxu0 0.0
        %416 = vmatprep.mubr.f32.mxu0 %v279
        %417 = vmatmul.mubr.f32.gmra.mrb[0].mxu0 %v175
        %v418 = vpop.f32.mrb[0].mxu0
        %v419 = vadd.f32 0.0, %v418
        %v420 = vpop.f32.mrb[0].mxu0
        %v421 = vadd.f32 0.0, %v420
        %422 = vdwg.mxu0
        %423 = vmatprep.subr.mxu0 0.0
        %424 = vmatpush1.msra.mxu0 %v180
        %425 = vmatprep.subr.mxu0 0.0
        %426 = vmatpush1.msra.mxu0 %v185
        %427 = vmatprep.subr.mxu0 0.0
        %428 = vmatpush1.msra.mxu0 %v190
        %429 = vmatprep.subr.mxu0 0.0
        %430 = vmatpush1.msra.mxu0 %v195
        %431 = vmatprep.subr.mxu0 0.0
        %432 = vmatpush1.msra.mxu0 %v200
        %433 = vmatprep.subr.mxu0 0.0
        %434 = vmatpush1.msra.mxu0 %v205
        %435 = vmatprep.subr.mxu0 0.0
        %436 = vmatpush1.msra.mxu0 %v210
        %437 = vmatprep.subr.mxu0 0.0
        %438 = vmatpush1.msra.mxu0 %v215
        %439 = vmatprep.subr.mxu0 0.0
        %440 = vmatpush1.msra.mxu0 %v220
        %441 = vmatprep.subr.mxu0 0.0
        %442 = vmatpush1.msra.mxu0 %v225
        %443 = vmatprep.subr.mxu0 0.0
        %444 = vmatpush1.msra.mxu0 %v230
        %445 = vmatprep.subr.mxu0 0.0
        %446 = vmatpush1.msra.mxu0 %v235
        %447 = vmatprep.subr.mxu0 0.0
        %448 = vmatpush1.msra.mxu0 %v240
        %449 = vmatprep.subr.mxu0 0.0
        %450 = vmatpush1.msra.mxu0 %v245
        %451 = vmatprep.subr.mxu0 0.0
        %452 = vmatpush1.msra.mxu0 %v250
        %453 = vmatprep.subr.mxu0 0.0
        %454 = vmatpush1.msra.mxu0 %v255
        %455 = vmatprep.subr.mxu0 0.0
        %456 = vmatpush1.msra.mxu0 %v260
        %457 = vmatprep.subr.mxu0 0.0
        %458 = vmatpush1.msra.mxu0 %v265
        %459 = vmatprep.subr.mxu0 0.0
        %460 = vmatpush1.msra.mxu0 %v270
        %461 = vmatprep.subr.mxu0 0.0
        %462 = vmatpush1.msra.mxu0 %v275
        %463 = vmatprep.subr.mxu0 0.0
        %464 = vmatpush1.msra.mxu0 0.0
        %465 = vmatprep.subr.mxu0 0.0
        %466 = vmatpush1.msra.mxu0 0.0
        %467 = vmatprep.subr.mxu0 0.0
        %468 = vmatpush1.msra.mxu0 0.0
        %469 = vmatprep.subr.mxu0 0.0
        %470 = vmatpush1.msra.mxu0 0.0
        %471 = vmatprep.subr.mxu0 0.0
        %472 = vmatpush1.msra.mxu0 0.0
        %473 = vmatprep.subr.mxu0 0.0
        %474 = vmatpush1.msra.mxu0 0.0
        %475 = vmatprep.subr.mxu0 0.0
        %476 = vmatpush1.msra.mxu0 0.0
        %477 = vmatprep.subr.mxu0 0.0
        %478 = vmatpush1.msra.mxu0 0.0
        %479 = vmatprep.subr.mxu0 0.0
        %480 = vmatpush1.msra.mxu0 0.0
        %481 = vmatprep.subr.mxu0 0.0
        %482 = vmatpush1.msra.mxu0 0.0
        %483 = vmatprep.subr.mxu0 0.0
        %484 = vmatpush1.msra.mxu0 0.0
        %485 = vmatprep.subr.mxu0 0.0
        %486 = vmatpush1.msra.mxu0 0.0
        %487 = vmatprep.mubr.f32.mxu0 %v279
        %488 = vmatmul.mubr.f32.gmra.mrb[0].mxu0 %v175
        %v489 = vpop.f32.mrb[0].mxu0
        %v490 = vadd.f32 0.0, %v489
        %v491 = vpop.f32.mrb[0].mxu0
        %492 = vdwg.mxu0
        %v497 = vcombine.low %v348, %v350
        %v498 = vcombine.low %v419, %v421
        %501 = vst [vmem:[%s174] sm:$0xff] %v497
        %502 = vst [vmem:[%s174 + $0x8] sm:$0xff] %v498
        %503 = vst [vmem:[%s174 + $0x10] sm:$0xf] %v490
        %s504 = sand.u32 %s75, 1
        %s505 = scalar_lea.sflag [#allocation4], %s504
        %s506 = sand.u32 %s75, 1
        %s507 = smul.addr %s506, 20
        %s508 = scalar_lea.vmem [#allocation7], %s507
        // Predicated region
        $region37: #{tpu_custom_call.1} parent=27 // pred_check
          %p509 = pneg %p85
        $region38: #{tpu_custom_call.1} parent=27 // pred_check_branch
          %511 = sbr.rel (%p509) target = $region40
        $region39: #{tpu_custom_call.1} parent=27 // pred_region
          %s513 = ssub.s32 320, 320
          %514 = vsyncadd %s505, %s513
          %s515 = smul.addr %s20, 5
          %s516 = smul.addr %s515, 64
          %s517 = scalar_lea.hbm %s2, %s516
          %s519 = sshll.u32 %s508, 4
          %s520 = int_to_ptr.vmem [resolvable:$true] %s519
          %522 = dma.vmem_to_hbm [thread:$0]  %s520, 320, %s517, %s505
        $region40: #{tpu_custom_call.1} parent=27 // pred_fallthru
          _
      $region28: #{tpu_custom_call.1} parent=5 // pred_fallthru
        _
      %p523 = scmp.le.s32.totalorder 2, %s15
      // Predicated region
      $region41: #{tpu_custom_call.1} parent=5 // pred_check
        %p524 = pneg %p523
      $region42: #{tpu_custom_call.1} parent=5 // pred_check_branch
        %526 = sbr.rel (%p524) target = $region44
      $region43: #{tpu_custom_call.1} parent=5 // pred_region
        %s527 = ssub.s32 %s15, 2
        // Predicated region
        $region45: #{tpu_custom_call.1} parent=43 // pred_check
          %p528 = pneg %p91
        $region46: #{tpu_custom_call.1} parent=43 // pred_check_branch
          %530 = sbr.rel (%p528) target = $region48
        $region47: #{tpu_custom_call.1} parent=43 // pred_region
          %s531 = sand.u32 %s76, 1
          %s532 = scalar_lea.sflag [#allocation4], %s531
          %s533 = sand.u32 %s76, 1
          %s534 = smul.addr %s533, 20
          %s535 = scalar_lea.vmem [#allocation7], %s534
          %536 = dma.done %s532, 320
        $region48: #{tpu_custom_call.1} parent=43 // pred_fallthru
          _
      $region44: #{tpu_custom_call.1} parent=5 // pred_fallthru
        _
    $region6: #{tpu_custom_call.1} parent=1 // loop_footer
      %s19 = sadd.s32 1, %s15
    $region7: #{tpu_custom_call.1} parent=1 // loop_footer_branch
      %14 = sbr.rel target = $region3
    $region8: #{tpu_custom_call.1} parent=1 // loop_exit
      _
    %537 = vsyncpa [#allocation3], 1
    %s538 = scalar_lea.sflag [#allocation3], 1
    %539 = vsyncpa %s538, 1
    %540 = vsyncpa [#allocation6], 1
    %541 = vsyncpa [#allocation4], 1
    %s542 = scalar_lea.sflag [#allocation4], 1
    %543 = vsyncpa %s542, 1

</llo_original>
